<compile_context>
chip_gen: v6e
topology: v6e:2x2x1
jax: 0.10.0
libtpu: 0.0.40
codegen_flags: <defaults>
</compile_context>

<pallas_src>
import math

import jax
import jax.numpy as jnp
from jax.experimental import pallas as pl
from jax.experimental.pallas import tpu as pltpu


def _pe_add_kernel(x_ref, pe_ref, o_ref):
    # x_ref : (1, T, block_c)  block for grid point (c, b)
    # pe_ref: (T, block_c)     pe slab; its block index depends only on the
    #                          outer c axis, so it is NOT re-fetched per batch.
    # o_ref : (1, T, block_c)
    o_ref[...] = (x_ref[...] + pe_ref[...]).astype(o_ref.dtype)


def make_positional_encoding_table(d_model: int, max_len: int = 32) -> jnp.ndarray:
    """Deterministic buffer construction matching nn.Module.__init__."""
    position = jnp.arange(max_len, dtype=jnp.float32)[:, None]                # (max_len, 1)
    div_term = jnp.exp(
        jnp.arange(0, d_model, 2, dtype=jnp.float32) * (-math.log(10000.0) / d_model)
    )                                                                           # (d_model/2,)
    pe = jnp.zeros((max_len, d_model), dtype=jnp.float32)
    pe = pe.at[:, 0::2].set(jnp.sin(position * div_term))
    pe = pe.at[:, 1::2].set(jnp.cos(position * div_term))
    return pe                                                                   # (max_len, d_model)


def make_positional_encoding_buffer(d_model: int, H: int, W: int,
                                    max_len: int = 32,
                                    dtype=jnp.float32) -> jnp.ndarray:
    """Module-buffer analogue of `register_buffer('pe', ...)`, pre-expanded
    over the spatial positions ONCE (hoisted out of forward, per perf review):
      pe_exp[t, d*H*W + k] == pe[t, d].
    NOTE: the add is performed in this dtype (PyTorch's f32 buffer would
    promote a bf16 x to f32; here the result stays in x.dtype)."""
    pe = make_positional_encoding_table(d_model, max_len)
    return jnp.repeat(pe.astype(dtype), H * W, axis=-1)                        # (max_len, d_model*H*W)


def _tile_target_bytes() -> int:
    """Generation-aware per-tile budget.  ~2 MiB tiles already sit on the
    measured ~85% HBM-roofline plateau; allow 4 MiB on 128-MiB-VMEM parts
    (v5e/v6e), stay at 2 MiB on v7x's 64 MiB so the 6-buffer double-buffered
    footprint stays small."""
    try:
        vmem = pltpu.get_tpu_info().vmem_capacity_bytes
    except Exception:
        vmem = 64 << 20
    return (4 << 20) if vmem >= (96 << 20) else (2 << 20)


def _pick_block_c(C: int, T: int, itemsize: int, target_bytes: int) -> int:
    """block_c: a multiple of 128 whose (T, block_c) tile fits target_bytes.
    Used with a cdiv grid (Pallas masks the partial last block), so C needs
    no divisibility property and there is NO full-C fallback."""
    max_lanes = max(128, (target_bytes // max(1, T * itemsize)) // 128 * 128)
    c_pad = pl.cdiv(C, 128) * 128
    block_c = min(max_lanes, c_pad)
    # v7x megacore: keep the outermost (parallel) C-block axis at extent >= 2
    # whenever C allows it, so both TensorCores get work.
    if pl.cdiv(C, block_c) < 2 and C > 128:
        block_c = max(128, pl.cdiv(pl.cdiv(C, 2), 128) * 128)
    return block_c


@jax.jit
def positional_encoding_forward(x: jnp.ndarray, pe_exp: jnp.ndarray) -> jnp.ndarray:
    """x: (B, T, D, H, W); pe_exp: (max_len, D*H*W) precomputed buffer."""
    B, T, D, H, W = x.shape
    C = D * H * W
    assert T <= pe_exp.shape[0] and pe_exp.shape[1] == C

    # Layout-free flatten of the contiguous trailing dims (no transpose).
    x_flat = x.reshape(B, T, C)
    # Tiny slice to the used rows; makes the pe block's sublane dim equal the
    # full array dim (legal for any T, no T % 8 requirement).
    pe_in = pe_exp[:T].astype(x.dtype)

    itemsize = jnp.dtype(x.dtype).itemsize
    block_c = _pick_block_c(C, T, itemsize, _tile_target_bytes())
    num_c = pl.cdiv(C, block_c)
    tile_bytes = T * block_c * itemsize
    # Double-buffered footprint: x, pe, out tiles x 2 each (+ margin).
    vmem_limit = min(max(6 * tile_bytes + (2 << 20), 32 << 20), 48 << 20)

    out_flat = pl.pallas_call(
        _pe_add_kernel,
        out_shape=jax.ShapeDtypeStruct((B, T, C), x.dtype),
        # C blocks outermost: pe's block index is constant across the inner b
        # loop (no per-batch pe re-DMA) and the outer parallel axis has
        # extent >= 2 for v7x's two TensorCores.
        grid=(num_c, B),
        in_specs=[
            pl.BlockSpec((1, T, block_c), lambda c, b: (b, 0, c)),
            pl.BlockSpec((T, block_c), lambda c, b: (0, c)),
        ],
        out_specs=pl.BlockSpec((1, T, block_c), lambda c, b: (b, 0, c)),
        input_output_aliases={0: 0},
        compiler_params=pltpu.CompilerParams(
            dimension_semantics=("parallel", "parallel"),
            vmem_limit_bytes=int(vmem_limit),
        ),
    )(x_flat, pe_in)

    # dropout(p=0.0) is the identity; nothing to do.
    # TODO(synk): bf16 inputs with small T could use a 2D (B, T*C) layout to
    # avoid sublane padding; irrelevant for f32 / this demo shape.
    return out_flat.reshape(B, T, D, H, W)


if __name__ == "__main__":
    # Small shapes consistent with the module: d_model=32, max_len=32, seq=8.
    B, T, D, H, W = 2, 8, 32, 4, 4
    key = jax.random.PRNGKey(0)
    x = jax.random.normal(key, (B, T, D, H, W), dtype=jnp.float32)

    # Precomputed module buffer (hoisted out of the per-call forward).
    pe_exp = make_positional_encoding_buffer(D, H, W, max_len=32, dtype=x.dtype)

    # Pure-JAX reference of the broadcast-add semantics (computed before the
    # kernel call since x is aliased to the kernel output).
    pe_tbl = make_positional_encoding_table(d_model=D, max_len=32)
    ref = x + pe_tbl[:T][None, :, :, None, None]

    out = jax.block_until_ready(positional_encoding_forward(x, pe_exp))

    assert out.shape == x.shape and out.dtype == x.dtype
    assert jnp.allclose(out, ref, atol=1e-6, rtol=1e-6), "mismatch vs reference"

    print("KERNEL_OK")
</pallas_src>

<mosaic_0001>
module attributes {stable_mosaic.version = 11 : i64} {
  func.func @_pe_add_kernel(%arg0: i32, %arg1: i32, %arg2: memref<1x8x256xf32, #tpu.memory_space<vmem>>, %arg3: memref<8x256xf32, #tpu.memory_space<vmem>>, %arg4: memref<1x8x256xf32, #tpu.memory_space<vmem>>) attributes {dimension_semantics = [#tpu.dimension_semantics<parallel>, #tpu.dimension_semantics<parallel>], iteration_bounds = array<i64: 2, 2>, scalar_prefetch = 0 : i64, scratch_operands = 0 : i64, tpu.core_type = #tpu.core_type<tc>, window_params = [{transform_indices = @transform_0, window_bounds = array<i64: 1, 8, 256>}, {transform_indices = @transform_1, window_bounds = array<i64: 8, 256>}, {transform_indices = @transform_2, window_bounds = array<i64: 1, 8, 256>}]} {
    %c0 = arith.constant 0 : index
    %c0_0 = arith.constant 0 : index
    %c0_1 = arith.constant 0 : index
    %0 = vector.load %arg2[%c0, %c0_0, %c0_1] : memref<1x8x256xf32, #tpu.memory_space<vmem>>, vector<1x8x256xf32>
    %c0_2 = arith.constant 0 : index
    %c0_3 = arith.constant 0 : index
    %1 = vector.load %arg3[%c0_2, %c0_3] : memref<8x256xf32, #tpu.memory_space<vmem>>, vector<8x256xf32>
    %2 = vector.shape_cast %1 : vector<8x256xf32> to vector<1x8x256xf32>
    %3 = arith.addf %0, %2 : vector<1x8x256xf32>
    %c0_4 = arith.constant 0 : index
    %c0_5 = arith.constant 0 : index
    %c0_6 = arith.constant 0 : index
    %4 = vector.load %arg4[%c0_4, %c0_5, %c0_6] : memref<1x8x256xf32, #tpu.memory_space<vmem>>, vector<1x8x256xf32>
    tpu.vector_store %arg4[%c0_4, %c0_5, %c0_6], %3 {strides = array<i32>} : memref<1x8x256xf32, #tpu.memory_space<vmem>>, vector<1x8x256xf32>,
    return
  }
  func.func @transform_0(%arg0: i32, %arg1: i32) -> (i32, i32, i32) {
    %c0_i32 = arith.constant 0 : i32
    %c0_i32_0 = arith.constant 0 : i32
    return %arg1, %c0_i32, %arg0 : i32, i32, i32
  }
  func.func @transform_1(%arg0: i32, %arg1: i32) -> (i32, i32) {
    %c0_i32 = arith.constant 0 : i32
    %c0_i32_0 = arith.constant 0 : i32
    return %c0_i32, %arg0 : i32, i32
  }
  func.func @transform_2(%arg0: i32, %arg1: i32) -> (i32, i32, i32) {
    %c0_i32 = arith.constant 0 : i32
    %c0_i32_0 = arith.constant 0 : i32
    return %arg1, %c0_i32, %arg0 : i32, i32, i32
  }
}

</mosaic_0001>

<llo_original>
// kernel: positional_encoding_forward.1
$region0: #{positional_encoding_forward.1}
  #allocation0 [shape = 'u32[]', space=smem, size = 0x4, offset = 0x4, fixed_abs, tag = 'smem constant byte address 0x4 - core index']
  #allocation1 [shape = 'u32[144,128]{1,0:T(1,128)}', space=vmem, size = 0x12000, scoped, tag = 'internal scratch']
  %s0 = inlined_call_operand.vmem [shape: f32[2,8,512], index: 0, kind: input, shape index: {}, may-alias: {0,2}]
  %s1 = inlined_call_operand.vmem [shape: f32[8,512], index: 1, kind: input, shape index: {}]
  %s2 = inlined_call_operand.vmem [shape: f32[2,8,512], index: 2, kind: output, shape index: {}, may-alias: {0,2}]
  %s3 = sld [smem:[#allocation0]]
  $region41: #{positional_encoding_forward.1} parent=0
    _
  %s5 = ssub.s32 1, %s3
  %s6 = scalar_select 0, %s5, %s3
  loop: start=0, step=1, limit=6
  $region2: #{positional_encoding_forward.1} parent=0 // loop_pre_header
    _
  $region3: #{positional_encoding_forward.1} parent=0 // loop_header
    %s8 = sphi 0, %s12
    %p9 = scmp.ge.s32.totalorder %s8, 6
    %s15 = sphi 0, %s27
    %s16 = sphi 0, %s23
    %s17 = sphi 0, %s15
    %s18 = sphi 0, %s16
    %s19 = sphi 0, %s17
    %s20 = sphi 0, %s18
    %s32 = sphi 0, %s34
    %s35 = sphi 0, %s32
    %s36 = sphi 0, %s35
    %s52 = sphi 0, %s36
    %s58 = sphi 0, %s60
    %s61 = sphi 0, %s58
    %s62 = sphi 0, %s61
    %s78 = sphi 0, %s62
    %s86 = sphi 0, %s88
    %s89 = sphi 0, %s86
    %s90 = sphi 0, %s89
    %s106 = sphi 0, %s90
  $region4: #{positional_encoding_forward.1} parent=0 // loop_header_branch
    %11 = sbr.rel (%p9) target = $region8
  $region5: #{positional_encoding_forward.1} parent=0 // loop_body
    %s13 = ssub.s32 %s8, 1
    %s14 = ssub.s32 %s8, 2
    %s21 = sadd.s32 1, %s16
    %p22 = scmp.ge.s32.totalorder %s21, 2
    %s23 = scalar_select %p22, 0, %s21
    %s24 = sadd.s32 1, %s15
    %s25 = scalar_select %p22, %s24, %s15
    %p26 = scmp.ge.s32.totalorder %s25, 2
    %s27 = scalar_select %p26, 0, %s25
    %s28 = ssub.s32 %s16, %s23
    %s29 = ssub.s32 %s15, %s27
    %s30 = sor.u32 %s28, %s29
    %p31 = scmp.eq.s32.totalorder %s30, 0
    %s33 = sadd.s32 %s32, 1
    %s34 = scalar_select %p31, %s32, %s33
    %p37 = pneg %p31
    %p38 = scmp.eq.s32.totalorder %s8, 3
    %p39 = por %p37, %p38
    %p40 = scmp.ne.s32.totalorder %s32, %s35
    %p41 = scmp.eq.s32.totalorder %s8, 0
    %p42 = por %p40, %p41
    %p43 = scmp.ne.s32.totalorder %s32, %s35
    %p44 = scmp.eq.s32.totalorder %s13, 3
    %p45 = por %p43, %p44
    %p46 = scmp.ne.s32.totalorder %s35, %s36
    %p47 = scmp.eq.s32.totalorder %s13, 0
    %p48 = por %p46, %p47
    %p49 = scmp.ne.s32.totalorder %s35, %s36
    %p50 = scmp.eq.s32.totalorder %s14, 3
    %p51 = por %p49, %p50
    %p53 = scmp.ne.s32.totalorder %s36, %s52
    %p54 = scmp.eq.s32.totalorder %s14, 0
    %p55 = por %p53, %p54
    %s56 = ssub.s32 %s15, %s27
    %p57 = scmp.eq.s32.totalorder %s56, 0
    %s59 = sadd.s32 %s58, 1
    %s60 = scalar_select %p57, %s58, %s59
    %p63 = pneg %p57
    %p64 = scmp.eq.s32.totalorder %s8, 3
    %p65 = por %p63, %p64
    %p66 = scmp.ne.s32.totalorder %s58, %s61
    %p67 = scmp.eq.s32.totalorder %s8, 0
    %p68 = por %p66, %p67
    %p69 = scmp.ne.s32.totalorder %s58, %s61
    %p70 = scmp.eq.s32.totalorder %s13, 3
    %p71 = por %p69, %p70
    %p72 = scmp.ne.s32.totalorder %s61, %s62
    %p73 = scmp.eq.s32.totalorder %s13, 0
    %p74 = por %p72, %p73
    %p75 = scmp.ne.s32.totalorder %s61, %s62
    %p76 = scmp.eq.s32.totalorder %s14, 3
    %p77 = por %p75, %p76
    %p79 = scmp.ne.s32.totalorder %s62, %s78
    %p80 = scmp.eq.s32.totalorder %s14, 0
    %p81 = por %p79, %p80
    %s82 = ssub.s32 %s16, %s23
    %s83 = ssub.s32 %s15, %s27
    %s84 = sor.u32 %s82, %s83
    %p85 = scmp.eq.s32.totalorder %s84, 0
    %s87 = sadd.s32 %s86, 1
    %s88 = scalar_select %p85, %s86, %s87
    %p91 = pneg %p85
    %p92 = scmp.eq.s32.totalorder %s8, 3
    %p93 = por %p91, %p92
    %p94 = scmp.ne.s32.totalorder %s86, %s89
    %p95 = scmp.eq.s32.totalorder %s8, 0
    %p96 = por %p94, %p95
    %p97 = scmp.ne.s32.totalorder %s86, %s89
    %p98 = scmp.eq.s32.totalorder %s13, 3
    %p99 = por %p97, %p98
    %p100 = scmp.ne.s32.totalorder %s89, %s90
    %p101 = scmp.eq.s32.totalorder %s13, 0
    %p102 = por %p100, %p101
    %p103 = scmp.ne.s32.totalorder %s89, %s90
    %p104 = scmp.eq.s32.totalorder %s14, 3
    %p105 = por %p103, %p104
    %p107 = scmp.ne.s32.totalorder %s90, %s106
    %p108 = scmp.eq.s32.totalorder %s14, 0
    %p109 = por %p107, %p108
    %p110 = scmp.le.s32.totalorder 1, %s8
    %p111 = scmp.lt.s32.totalorder %s8, 5
    %p112 = pnand %p110, %p111
    %p113 = pneg %p112
    // Predicated region
    $region9: #{positional_encoding_forward.1} parent=5 // pred_check
      _
    $region10: #{positional_encoding_forward.1} parent=5 // pred_check_branch
      %115 = sbr.rel (%p112) target = $region12
    $region11: #{positional_encoding_forward.1} parent=5 // pred_region
      %s116 = ssub.s32 %s8, 1
    $region12: #{positional_encoding_forward.1} parent=5 // pred_fallthru
      _
    %p117 = scmp.lt.s32.totalorder %s8, 4
    // Predicated region
    $region13: #{positional_encoding_forward.1} parent=5 // pred_check
      %p118 = pneg %p117
    $region14: #{positional_encoding_forward.1} parent=5 // pred_check_branch
      %120 = sbr.rel (%p118) target = $region16
    $region15: #{positional_encoding_forward.1} parent=5 // pred_region
      // Predicated region
      $region17: #{positional_encoding_forward.1} parent=15 // pred_check
        %p121 = pneg %p42
      $region18: #{positional_encoding_forward.1} parent=15 // pred_check_branch
        %123 = sbr.rel (%p121) target = $region20
      $region19: #{positional_encoding_forward.1} parent=15 // pred_region
        %s124 = smul.u32 2, %s15
        %p125 = scmp.lt.s32.totalorder %s16, 1
        %s126 = scalar_select %p125, %s16, 1
        %p127 = scmp.lt.s32.totalorder %s124, 3
        %s128 = scalar_select %p127, %s124, 3
        %s129 = smul.addr %s126, 4
        %s130 = sadd.s32 %s128, %s129
        %s131 = smul.addr %s130, 8
        %s132 = scalar_lea.vmem %s0, %s131
        %s133 = smul.u32 2, %s15
      $region20: #{positional_encoding_forward.1} parent=15 // pred_fallthru
        _
      // Predicated region
      $region21: #{positional_encoding_forward.1} parent=15 // pred_check
        %p134 = pneg %p68
      $region22: #{positional_encoding_forward.1} parent=15 // pred_check_branch
        %136 = sbr.rel (%p134) target = $region24
      $region23: #{positional_encoding_forward.1} parent=15 // pred_region
        %s137 = smul.u32 2, %s15
        %p138 = scmp.lt.s32.totalorder %s137, 3
        %s139 = scalar_select %p138, %s137, 3
        %s140 = smul.addr %s139, 8
        %s141 = scalar_lea.vmem %s1, %s140
        %s142 = smul.u32 2, %s15
      $region24: #{positional_encoding_forward.1} parent=15 // pred_fallthru
        _
    $region16: #{positional_encoding_forward.1} parent=5 // pred_fallthru
      _
    %p143 = scmp.le.s32.totalorder 1, %s8
    %p144 = scmp.lt.s32.totalorder %s8, 5
    %p145 = pnand %p143, %p144
    %p146 = pneg %p145
    // Predicated region
    $region25: #{positional_encoding_forward.1} parent=5 // pred_check
      _
    $region26: #{positional_encoding_forward.1} parent=5 // pred_check_branch
      %148 = sbr.rel (%p145) target = $region28
    $region27: #{positional_encoding_forward.1} parent=5 // pred_region
      %s149 = ssub.s32 %s8, 1
      %s150 = smul.u32 2, %s17
      %p151 = scmp.lt.s32.totalorder %s18, 1
      %s152 = scalar_select %p151, %s18, 1
      %p153 = scmp.lt.s32.totalorder %s150, 3
      %s154 = scalar_select %p153, %s150, 3
      %s155 = smul.addr %s152, 4
      %s156 = sadd.s32 %s154, %s155
      %s157 = smul.addr %s156, 8
      %s158 = scalar_lea.vmem %s0, %s157
      %p159 = pneg %p48
      %p160 = pneg %p45
      %s161 = smul.u32 2, %s17
      %p162 = scmp.lt.s32.totalorder %s161, 3
      %s163 = scalar_select %p162, %s161, 3
      %s164 = smul.addr %s163, 8
      %s165 = scalar_lea.vmem %s1, %s164
      %p166 = pneg %p74
      %p167 = pneg %p71
      %p168 = pneg %p102
      %p169 = pneg %p99
      %s170 = smul.u32 2, %s17
      %p171 = scmp.lt.s32.totalorder %s18, 1
      %s172 = scalar_select %p171, %s18, 1
      %p173 = scmp.lt.s32.totalorder %s170, 3
      %s174 = scalar_select %p173, %s170, 3
      %s175 = smul.addr %s172, 4
      %s176 = sadd.s32 %s174, %s175
      %s177 = smul.addr %s176, 8
      %s178 = scalar_lea.vmem %s2, %s177
      %s179 = smul.u32 2, %s17
      %p180 = scmp.lt.s32.totalorder %s18, 1
      %s181 = scalar_select %p180, %s18, 1
      %p182 = scmp.lt.s32.totalorder %s179, 3
      %s183 = scalar_select %p182, %s179, 3
      %s184 = smul.addr %s181, 4
      %s185 = sadd.s32 %s183, %s184
      %s186 = smul.addr %s185, 8
      %s187 = scalar_lea.vmem %s0, %s186
      %s188 = smul.u32 2, %s17
      %s189 = smul.u32 2, %s17
      %p190 = scmp.lt.s32.totalorder %s189, 3
      %s191 = scalar_select %p190, %s189, 3
      %s192 = smul.addr %s191, 8
      %s193 = scalar_lea.vmem %s1, %s192
      %s194 = smul.u32 2, %s17
      %s195 = smul.u32 2, %s17
      %p196 = scmp.lt.s32.totalorder %s18, 1
      %s197 = scalar_select %p196, %s18, 1
      %p198 = scmp.lt.s32.totalorder %s195, 3
      %s199 = scalar_select %p198, %s195, 3
      %s200 = smul.addr %s197, 4
      %s201 = sadd.s32 %s199, %s200
      %s202 = smul.addr %s201, 8
      %s203 = scalar_lea.vmem %s2, %s202
      %s204 = smul.u32 2, %s17
      %v205 = vld [vmem:[%s187] sm:$0xff]
      %v206 = vld [vmem:[%s187 + $0x8] sm:$0xff]
      %v207 = vld [vmem:[%s193] sm:$0xff]
      %v208 = vld [vmem:[%s193 + $0x8] sm:$0xff]
      %v209 = vadd.f32 %v205, %v207
      %v210 = vadd.f32 %v206, %v208
      %211 = vst [vmem:[%s203] sm:$0xff] %v209
      %212 = vst [vmem:[%s203 + $0x8] sm:$0xff] %v210
      %s213 = smul.u32 2, %s17
      %p214 = scmp.lt.s32.totalorder %s18, 1
      %s215 = scalar_select %p214, %s18, 1
      %p216 = scmp.lt.s32.totalorder %s213, 3
      %s217 = scalar_select %p216, %s213, 3
      %s218 = smul.addr %s215, 4
      %s219 = sadd.s32 %s217, %s218
      %s220 = smul.addr %s219, 8
      %s221 = scalar_lea.vmem %s2, %s220
      // Predicated region
      $region29: #{positional_encoding_forward.1} parent=27 // pred_check
        %p222 = pneg %p99
      $region30: #{positional_encoding_forward.1} parent=27 // pred_check_branch
        %224 = sbr.rel (%p222) target = $region32
      $region31: #{positional_encoding_forward.1} parent=27 // pred_region
        %s225 = smul.u32 2, %s17
      $region32: #{positional_encoding_forward.1} parent=27 // pred_fallthru
        _
    $region28: #{positional_encoding_forward.1} parent=5 // pred_fallthru
      _
    %p226 = scmp.le.s32.totalorder 2, %s8
    // Predicated region
    $region33: #{positional_encoding_forward.1} parent=5 // pred_check
      %p227 = pneg %p226
    $region34: #{positional_encoding_forward.1} parent=5 // pred_check_branch
      %229 = sbr.rel (%p227) target = $region36
    $region35: #{positional_encoding_forward.1} parent=5 // pred_region
      %s230 = ssub.s32 %s8, 2
      // Predicated region
      $region37: #{positional_encoding_forward.1} parent=35 // pred_check
        %p231 = pneg %p105
      $region38: #{positional_encoding_forward.1} parent=35 // pred_check_branch
        %233 = sbr.rel (%p231) target = $region40
      $region39: #{positional_encoding_forward.1} parent=35 // pred_region
        %s234 = smul.u32 2, %s19
        %p235 = scmp.lt.s32.totalorder %s20, 1
        %s236 = scalar_select %p235, %s20, 1
        %p237 = scmp.lt.s32.totalorder %s234, 3
        %s238 = scalar_select %p237, %s234, 3
        %s239 = smul.addr %s236, 4
        %s240 = sadd.s32 %s238, %s239
        %s241 = smul.addr %s240, 8
        %s242 = scalar_lea.vmem %s2, %s241
      $region40: #{positional_encoding_forward.1} parent=35 // pred_fallthru
        _
    $region36: #{positional_encoding_forward.1} parent=5 // pred_fallthru
      _
  $region6: #{positional_encoding_forward.1} parent=0 // loop_footer
    %s12 = sadd.s32 1, %s8
  $region7: #{positional_encoding_forward.1} parent=0 // loop_footer_branch
    %7 = sbr.rel target = $region3
  $region8: #{positional_encoding_forward.1} parent=0 // loop_exit
    _

</llo_original>
